<compile_context>
chip_gen: v7x
topology: tpu7x:2x2x1
jax: 0.10.0
libtpu: 0.0.40
codegen_flags: <defaults>
</compile_context>

<pallas_src>
import jax
import jax.numpy as jnp
from jax.experimental import pallas as pl
from jax.experimental.pallas import tpu as pltpu

LANES = 128
TR_MAX = 1024          # sublane rows per grid step (512 KiB / stream / buffer)
_PAD_PRED = 0.5        # keeps log() finite in padded / OOB lanes
_PAD_GT = 2.0          # gt==1 and gt<1 both false -> zero contribution


def _round_up(x, m):
    return ((x + m - 1) // m) * m


def _make_focal_kernel(tr, valid_rows, steps_per_core, has_weights, needs_mask):
    """Builds the per-tile reduction kernel.

    Reduces a (tr, 128) tile of pred/gt[/weights] into per-lane partial sums of
    [pos_loss, neg_loss, num_pos], accumulated into a resident (3, 128) output
    block (one block per TensorCore along the parallel grid axis).
    """

    def kernel(*refs):
        if has_weights:
            pred_ref, gt_ref, w_ref, out_ref = refs
        else:
            pred_ref, gt_ref, out_ref = refs

        s = pl.program_id(1)

        @pl.when(s == 0)
        def _init():
            out_ref[...] = jnp.zeros_like(out_ref)

        pred = pred_ref[...].astype(jnp.float32)
        gt = gt_ref[...].astype(jnp.float32)
        w = w_ref[...].astype(jnp.float32) if has_weights else None

        if needs_mask:
            # Rows at/after `valid_rows` are out-of-bounds reads (undefined
            # data): force inert, finite values so they contribute exactly 0.
            step = pl.program_id(0) * steps_per_core + s
            row = jax.lax.broadcasted_iota(jnp.int32, (tr, LANES), 0) + step * tr
            in_bounds = row < valid_rows
            pred = jnp.where(in_bounds, pred, _PAD_PRED)
            gt = jnp.where(in_bounds, gt, _PAD_GT)
            if has_weights:
                w = jnp.where(in_bounds, w, 0.0)

        is_pos = gt == 1.0
        pos_f = is_pos.astype(jnp.float32)
        neg_f = (gt < 1.0).astype(jnp.float32)
        if has_weights:
            pos_inds = pos_f * w
            neg_inds = neg_f * w
        else:
            pos_inds = pos_f
            neg_inds = neg_f

        one_m_pred = 1.0 - pred
        one_m_gt = 1.0 - gt
        one_m_gt2 = one_m_gt * one_m_gt
        neg_weights = one_m_gt2 * one_m_gt2            # (1 - gt) ** 4, mul only

        # Single EUP log shared by both branches (the other branch's mask is 0).
        lg = jnp.log(jnp.where(is_pos, pred, one_m_pred))

        pos_loss = lg * (one_m_pred * one_m_pred) * pos_inds
        neg_loss = lg * (pred * pred) * neg_weights * neg_inds

        pos_sum = jnp.sum(pos_loss, axis=0, keepdims=True)     # (1, LANES)
        neg_sum = jnp.sum(neg_loss, axis=0, keepdims=True)
        np_sum = jnp.sum(pos_inds, axis=0, keepdims=True)

        # Fused single (3, 128) accumulator update (no per-row masked stores).
        rid = jax.lax.broadcasted_iota(jnp.int32, (3, LANES), 0)
        partial = jnp.where(rid == 0, pos_sum,
                            jnp.where(rid == 1, neg_sum, np_sum))
        out_ref[...] += partial

    return kernel


@jax.jit
def focal_loss(pred, gt, weights=None):
    """Pallas implementation of FocalLoss.forward(out, target, weights).

    pred, gt, weights: (b, n, 1) float arrays. Returns a scalar f32 loss.
    """
    total = pred.size
    pred_f = pred.reshape(-1)
    gt_f = gt.reshape(-1)
    w_f = None if weights is None else weights.reshape(-1)

    # Only when b*n isn't a multiple of 128 do we pad (<=127 inert elements).
    # Inert values (gt=2, pred=0.5, w=0) contribute exactly zero to all sums.
    pad = (-total) % LANES
    if pad:
        pred_f = jnp.pad(pred_f, (0, pad), constant_values=_PAD_PRED)
        gt_f = jnp.pad(gt_f, (0, pad), constant_values=_PAD_GT)
        if w_f is not None:
            w_f = jnp.pad(w_f, (0, pad), constant_values=0.0)

    rows = (total + pad) // LANES               # lane-major (rows, 128) view
    tr = min(TR_MAX, _round_up(rows, 16))       # 16-row multiple (bf16-safe)
    nblk = pl.cdiv(rows, tr)
    num_cores = 2 if nblk >= 2 else 1           # v7x megacore; no-op on v5e/v6e
    steps = pl.cdiv(nblk, num_cores)
    needs_mask = (num_cores * steps * tr) != rows

    pred2d = pred_f.reshape(rows, LANES)        # free: contiguous reshape
    gt2d = gt_f.reshape(rows, LANES)

    def in_index(c, s):
        # Clamp so the (rare) extra step on an odd block count re-reads the
        # last block; its contribution is fully masked to zero in-kernel.
        return (jnp.minimum(c * steps + s, nblk - 1), 0)

    in_spec = pl.BlockSpec((tr, LANES), in_index)
    in_specs = [in_spec, in_spec]
    operands = [pred2d, gt2d]
    if w_f is not None:
        in_specs.append(in_spec)
        operands.append(w_f.reshape(rows, LANES))

    kernel = _make_focal_kernel(tr, rows, steps, w_f is not None, needs_mask)

    sums = pl.pallas_call(
        kernel,
        out_shape=jax.ShapeDtypeStruct((num_cores, 3, LANES), jnp.float32),
        grid_spec=pltpu.PrefetchScalarGridSpec(
            num_scalar_prefetch=0,
            grid=(num_cores, steps),
            in_specs=in_specs,
            out_specs=pl.BlockSpec((None, 3, LANES), lambda c, s: (c, 0, 0)),
        ),
        compiler_params=pltpu.CompilerParams(
            dimension_semantics=("parallel", "arbitrary")),
    )(*operands)

    lane_sums = jnp.sum(sums, axis=0)           # (3, LANES)
    pos_loss = jnp.sum(lane_sums[0])
    neg_loss = jnp.sum(lane_sums[1])
    num_pos = jnp.sum(lane_sums[2])

    safe_num_pos = jnp.where(num_pos == 0, 1.0, num_pos)
    return jnp.where(num_pos == 0, -neg_loss,
                     -(pos_loss + neg_loss) / safe_num_pos)


def _reference_focal_loss(pred, gt, weights=None):
    """Pure-JAX reference mirroring the PyTorch _neg_loss exactly."""
    pred = pred.astype(jnp.float32)
    gt = gt.astype(jnp.float32)
    if weights is None:
        weights = jnp.ones_like(pred)
    weights = weights.astype(jnp.float32)
    pos_inds = (gt == 1.0).astype(jnp.float32) * weights
    neg_inds = (gt < 1.0).astype(jnp.float32) * weights
    neg_weights = (1.0 - gt) ** 4
    pos_loss = jnp.log(pred) * (1.0 - pred) ** 2 * pos_inds
    neg_loss = jnp.log(1.0 - pred) * pred ** 2 * neg_weights * neg_inds
    num_pos = jnp.sum(pos_inds)
    pos_loss = jnp.sum(pos_loss)
    neg_loss = jnp.sum(neg_loss)
    return jnp.where(num_pos == 0, -neg_loss,
                     -(pos_loss + neg_loss) / jnp.where(num_pos == 0, 1.0, num_pos))


def _make_inputs(key, b, n):
    k_pred, k_gt, k_mask, k_w = jax.random.split(key, 4)
    pred = jax.random.uniform(k_pred, (b, n, 1), jnp.float32,
                              minval=0.01, maxval=0.99)
    gt_soft = jax.random.uniform(k_gt, (b, n, 1), jnp.float32,
                                 minval=0.0, maxval=0.999)
    pos_mask = jax.random.uniform(k_mask, (b, n, 1)) < 0.05   # gt.eq(1) positives
    gt = jnp.where(pos_mask, 1.0, gt_soft)
    weights = jax.random.uniform(k_w, (b, n, 1), jnp.float32,
                                 minval=0.5, maxval=1.5)
    return pred, gt, weights


if __name__ == "__main__":
    key = jax.random.PRNGKey(0)
    k_small, k_big = jax.random.split(key)

    # Small case matching the module docstring (b, n, 1): padded, single-block,
    # single-core path; both weighted and unweighted kernels.
    pred, gt, weights = _make_inputs(k_small, 2, 1000)
    out = focal_loss(pred, gt, weights)
    jax.block_until_ready(out)
    ref = _reference_focal_loss(pred, gt, weights)
    assert jnp.allclose(out, ref, rtol=1e-4, atol=1e-5), (out, ref)

    out_nw = focal_loss(pred, gt)
    jax.block_until_ready(out_nw)
    ref_nw = _reference_focal_loss(pred, gt)
    assert jnp.allclose(out_nw, ref_nw, rtol=1e-4, atol=1e-5), (out_nw, ref_nw)

    # Larger case: exercises multi-block tiles, the partial last block's
    # in-kernel masking, the dual-core parallel axis and the clamped odd-block
    # extra step.
    pred_b, gt_b, weights_b = _make_inputs(k_big, 2, 150000)
    out_b = focal_loss(pred_b, gt_b, weights_b)
    jax.block_until_ready(out_b)
    ref_b = _reference_focal_loss(pred_b, gt_b, weights_b)
    assert jnp.allclose(out_b, ref_b, rtol=1e-4, atol=1e-5), (out_b, ref_b)

    print("KERNEL_OK")
</pallas_src>

<mosaic_0001>
module attributes {stable_mosaic.version = 11 : i64} {
  func.func @kernel(%arg0: i32, %arg1: i32, %arg2: memref<16x128xf32, #tpu.memory_space<vmem>>, %arg3: memref<16x128xf32, #tpu.memory_space<vmem>>, %arg4: memref<16x128xf32, #tpu.memory_space<vmem>>, %arg5: memref<1x3x128xf32, #tpu.memory_space<vmem>>) attributes {dimension_semantics = [#tpu.dimension_semantics<parallel>, #tpu.dimension_semantics<arbitrary>], iteration_bounds = array<i64: 1, 1>, scalar_prefetch = 0 : i64, scratch_operands = 0 : i64, tpu.core_type = #tpu.core_type<tc>, window_params = [{transform_indices = @transform_0, window_bounds = array<i64: 16, 128>}, {transform_indices = @transform_1, window_bounds = array<i64: 16, 128>}, {transform_indices = @transform_2, window_bounds = array<i64: 16, 128>}, {transform_indices = @transform_3, window_bounds = array<i64: 1, 3, 128>}]} {
    %c0_i32 = arith.constant 0 : i32
    %0 = arith.cmpi eq, %arg1, %c0_i32 : i32
    %1 = arith.extui %0 : i1 to i32
    %c0_i32_0 = arith.constant 0 : i32
    %2 = arith.cmpi ne, %1, %c0_i32_0 : i32
    scf.if %2 {
      %cst_19 = arith.constant 0.000000e+00 : f32
      %56 = vector.broadcast %cst_19 : f32 to vector<3x128xf32>
      %c0_20 = arith.constant 0 : index
      %c0_21 = arith.constant 0 : index
      %c0_22 = arith.constant 0 : index
      %57 = vector.load %arg5[%c0_20, %c0_21, %c0_22] : memref<1x3x128xf32, #tpu.memory_space<vmem>>, vector<1x3x128xf32>
      %58 = vector.shape_cast %57 : vector<1x3x128xf32> to vector<3x128xf32>
      %59 = vector.shape_cast %56 : vector<3x128xf32> to vector<1x3x128xf32>
      tpu.vector_store %arg5[%c0_20, %c0_21, %c0_22], %59 {strides = array<i32>} : memref<1x3x128xf32, #tpu.memory_space<vmem>>, vector<1x3x128xf32>,
    } else {
    }
    %c0 = arith.constant 0 : index
    %c0_1 = arith.constant 0 : index
    %3 = vector.load %arg2[%c0, %c0_1] : memref<16x128xf32, #tpu.memory_space<vmem>>, vector<16x128xf32>
    %c0_2 = arith.constant 0 : index
    %c0_3 = arith.constant 0 : index
    %4 = vector.load %arg3[%c0_2, %c0_3] : memref<16x128xf32, #tpu.memory_space<vmem>>, vector<16x128xf32>
    %c0_4 = arith.constant 0 : index
    %c0_5 = arith.constant 0 : index
    %5 = vector.load %arg4[%c0_4, %c0_5] : memref<16x128xf32, #tpu.memory_space<vmem>>, vector<16x128xf32>
    %cst = arith.constant 1.000000e+00 : f32
    %6 = vector.broadcast %cst : f32 to vector<16x128xf32>
    %7 = arith.cmpf oeq, %4, %6 : vector<16x128xf32>
    %8 = arith.extui %7 : vector<16x128xi1> to vector<16x128xi32>
    %9 = arith.sitofp %8 : vector<16x128xi32> to vector<16x128xf32>
    %cst_6 = arith.constant 1.000000e+00 : f32
    %10 = vector.broadcast %cst_6 : f32 to vector<16x128xf32>
    %11 = arith.cmpf olt, %4, %10 : vector<16x128xf32>
    %12 = arith.extui %11 : vector<16x128xi1> to vector<16x128xi32>
    %13 = arith.sitofp %12 : vector<16x128xi32> to vector<16x128xf32>
    %14 = arith.mulf %9, %5 : vector<16x128xf32>
    %15 = arith.mulf %13, %5 : vector<16x128xf32>
    %cst_7 = arith.constant 1.000000e+00 : f32
    %16 = vector.broadcast %cst_7 : f32 to vector<16x128xf32>
    %17 = arith.subf %16, %3 : vector<16x128xf32>
    %cst_8 = arith.constant 1.000000e+00 : f32
    %18 = vector.broadcast %cst_8 : f32 to vector<16x128xf32>
    %19 = arith.subf %18, %4 : vector<16x128xf32>
    %20 = arith.mulf %19, %19 : vector<16x128xf32>
    %21 = arith.mulf %20, %20 : vector<16x128xf32>
    %22 = arith.select %7, %3, %17 : vector<16x128xi1>, vector<16x128xf32>
    %23 = math.log %22 : vector<16x128xf32>
    %24 = arith.mulf %17, %17 : vector<16x128xf32>
    %25 = arith.mulf %23, %24 : vector<16x128xf32>
    %26 = arith.mulf %25, %14 : vector<16x128xf32>
    %27 = arith.mulf %3, %3 : vector<16x128xf32>
    %28 = arith.mulf %23, %27 : vector<16x128xf32>
    %29 = arith.mulf %28, %21 : vector<16x128xf32>
    %30 = arith.mulf %29, %15 : vector<16x128xf32>
    %cst_9 = arith.constant dense<0.000000e+00> : vector<128xf32>
    %31 = vector.multi_reduction <add>, %26, %cst_9 [0] : vector<16x128xf32> to vector<128xf32>
    %32 = vector.shape_cast %31 : vector<128xf32> to vector<1x128xf32>
    %cst_10 = arith.constant dense<0.000000e+00> : vector<128xf32>
    %33 = vector.multi_reduction <add>, %30, %cst_10 [0] : vector<16x128xf32> to vector<128xf32>
    %34 = vector.shape_cast %33 : vector<128xf32> to vector<1x128xf32>
    %cst_11 = arith.constant dense<0.000000e+00> : vector<128xf32>
    %35 = vector.multi_reduction <add>, %14, %cst_11 [0] : vector<16x128xf32> to vector<128xf32>
    %36 = vector.shape_cast %35 : vector<128xf32> to vector<1x128xf32>
    %37 = tpu.iota {dimensions = array<i32: 0>} : vector<3x128xi32>
    %c0_i32_12 = arith.constant 0 : i32
    %38 = vector.broadcast %c0_i32_12 : i32 to vector<3x128xi32>
    %39 = arith.cmpi eq, %37, %38 : vector<3x128xi32>
    %c1_i32 = arith.constant 1 : i32
    %40 = vector.broadcast %c1_i32 : i32 to vector<3x128xi32>
    %41 = arith.cmpi eq, %37, %40 : vector<3x128xi32>
    %42 = vector.shape_cast %34 : vector<1x128xf32> to vector<1x128xf32>
    %43 = vector.broadcast %42 : vector<1x128xf32> to vector<3x128xf32>
    %44 = vector.shape_cast %36 : vector<1x128xf32> to vector<1x128xf32>
    %45 = vector.broadcast %44 : vector<1x128xf32> to vector<3x128xf32>
    %46 = arith.select %41, %43, %45 : vector<3x128xi1>, vector<3x128xf32>
    %47 = vector.shape_cast %32 : vector<1x128xf32> to vector<1x128xf32>
    %48 = vector.broadcast %47 : vector<1x128xf32> to vector<3x128xf32>
    %49 = arith.select %39, %48, %46 : vector<3x128xi1>, vector<3x128xf32>
    %c0_13 = arith.constant 0 : index
    %c0_14 = arith.constant 0 : index
    %c0_15 = arith.constant 0 : index
    %50 = vector.load %arg5[%c0_13, %c0_14, %c0_15] : memref<1x3x128xf32, #tpu.memory_space<vmem>>, vector<1x3x128xf32>
    %51 = vector.shape_cast %50 : vector<1x3x128xf32> to vector<3x128xf32>
    %52 = arith.addf %51, %49 : vector<3x128xf32>
    %c0_16 = arith.constant 0 : index
    %c0_17 = arith.constant 0 : index
    %c0_18 = arith.constant 0 : index
    %53 = vector.load %arg5[%c0_16, %c0_17, %c0_18] : memref<1x3x128xf32, #tpu.memory_space<vmem>>, vector<1x3x128xf32>
    %54 = vector.shape_cast %53 : vector<1x3x128xf32> to vector<3x128xf32>
    %55 = vector.shape_cast %52 : vector<3x128xf32> to vector<1x3x128xf32>
    tpu.vector_store %arg5[%c0_16, %c0_17, %c0_18], %55 {strides = array<i32>} : memref<1x3x128xf32, #tpu.memory_space<vmem>>, vector<1x3x128xf32>,
    return
  }
  func.func @transform_0(%arg0: i32, %arg1: i32) -> (i32, i32) {
    %c1_i32 = arith.constant 1 : i32
    %0 = arith.muli %arg0, %c1_i32 : i32
    %1 = arith.addi %0, %arg1 : i32
    %c0_i32 = arith.constant 0 : i32
    %2 = arith.minsi %1, %c0_i32 : i32
    %c0_i32_0 = arith.constant 0 : i32
    %c0_i32_1 = arith.constant 0 : i32
    return %2, %c0_i32_0 : i32, i32
  }
  func.func @transform_1(%arg0: i32, %arg1: i32) -> (i32, i32) {
    %c1_i32 = arith.constant 1 : i32
    %0 = arith.muli %arg0, %c1_i32 : i32
    %1 = arith.addi %0, %arg1 : i32
    %c0_i32 = arith.constant 0 : i32
    %2 = arith.minsi %1, %c0_i32 : i32
    %c0_i32_0 = arith.constant 0 : i32
    %c0_i32_1 = arith.constant 0 : i32
    return %2, %c0_i32_0 : i32, i32
  }
  func.func @transform_2(%arg0: i32, %arg1: i32) -> (i32, i32) {
    %c1_i32 = arith.constant 1 : i32
    %0 = arith.muli %arg0, %c1_i32 : i32
    %1 = arith.addi %0, %arg1 : i32
    %c0_i32 = arith.constant 0 : i32
    %2 = arith.minsi %1, %c0_i32 : i32
    %c0_i32_0 = arith.constant 0 : i32
    %c0_i32_1 = arith.constant 0 : i32
    return %2, %c0_i32_0 : i32, i32
  }
  func.func @transform_3(%arg0: i32, %arg1: i32) -> (i32, i32, i32) {
    %c0_i32 = arith.constant 0 : i32
    %c0_i32_0 = arith.constant 0 : i32
    %c0_i32_1 = arith.constant 0 : i32
    return %arg0, %c0_i32, %c0_i32_0 : i32, i32, i32
  }
}

</mosaic_0001>

<llo_original>
// kernel: focal_loss.1
$region0: #{focal_loss.1}
  #allocation0 [shape = 'u32[]', space=smem, size = 0x4, offset = 0x4, fixed_abs, tag = 'smem constant byte address 0x4 - core index']
  #allocation1 [shape = 'u32[144,128]{1,0:T(1,128)}', space=vmem, size = 0x12000, scoped, tag = 'internal scratch']
  %s0 = inlined_call_operand.vmem [shape: f32[16,128], index: 0, kind: input, shape index: {}]
  %s1 = inlined_call_operand.vmem [shape: f32[16,128], index: 1, kind: input, shape index: {}]
  %s2 = inlined_call_operand.vmem [shape: f32[16,128], index: 2, kind: input, shape index: {}]
  %s3 = inlined_call_operand.vmem [shape: f32[1,3,128], index: 3, kind: output, shape index: {}]
  %s4 = sld [smem:[#allocation0]]
  $region26: #{focal_loss.1} parent=0
    _
  %s6 = ssub.s32 1, %s4
  %s7 = scalar_select 0, %s6, %s4
  // Predicated region
  $region2: #{focal_loss.1} parent=0 // pred_check
    _
  $region3: #{focal_loss.1} parent=0 // pred_check_branch
    %9 = sbr.rel (0) target = $region5
  $region4: #{focal_loss.1} parent=0 // pred_region
    %s10 = sadd.s32 0, 0
    %p11 = scmp.lt.s32.totalorder %s10, 0
    %s12 = scalar_select %p11, %s10, 0
    %s13 = smul.u32 2, %s12
    %p14 = scmp.lt.s32.totalorder %s13, 1
    %s15 = scalar_select %p14, %s13, 1
    %s16 = smul.addr %s15, 8
    %s17 = scalar_lea.vmem %s0, %s16
    %s18 = sadd.s32 0, 0
    %p19 = scmp.lt.s32.totalorder %s18, 0
    %s20 = scalar_select %p19, %s18, 0
    %s21 = smul.u32 2, %s20
  $region5: #{focal_loss.1} parent=0 // pred_fallthru
    _
  // Predicated region
  $region6: #{focal_loss.1} parent=0 // pred_check
    _
  $region7: #{focal_loss.1} parent=0 // pred_check_branch
    %23 = sbr.rel (0) target = $region9
  $region8: #{focal_loss.1} parent=0 // pred_region
    %s24 = sadd.s32 0, 0
    %p25 = scmp.lt.s32.totalorder %s24, 0
    %s26 = scalar_select %p25, %s24, 0
    %s27 = smul.u32 2, %s26
    %p28 = scmp.lt.s32.totalorder %s27, 1
    %s29 = scalar_select %p28, %s27, 1
    %s30 = smul.addr %s29, 8
    %s31 = scalar_lea.vmem %s1, %s30
    %s32 = sadd.s32 0, 0
    %p33 = scmp.lt.s32.totalorder %s32, 0
    %s34 = scalar_select %p33, %s32, 0
    %s35 = smul.u32 2, %s34
  $region9: #{focal_loss.1} parent=0 // pred_fallthru
    _
  // Predicated region
  $region10: #{focal_loss.1} parent=0 // pred_check
    _
  $region11: #{focal_loss.1} parent=0 // pred_check_branch
    %37 = sbr.rel (0) target = $region13
  $region12: #{focal_loss.1} parent=0 // pred_region
    %s38 = sadd.s32 0, 0
    %p39 = scmp.lt.s32.totalorder %s38, 0
    %s40 = scalar_select %p39, %s38, 0
    %s41 = smul.u32 2, %s40
    %p42 = scmp.lt.s32.totalorder %s41, 1
    %s43 = scalar_select %p42, %s41, 1
    %s44 = smul.addr %s43, 8
    %s45 = scalar_lea.vmem %s2, %s44
    %s46 = sadd.s32 0, 0
    %p47 = scmp.lt.s32.totalorder %s46, 0
    %s48 = scalar_select %p47, %s46, 0
    %s49 = smul.u32 2, %s48
  $region13: #{focal_loss.1} parent=0 // pred_fallthru
    _
  %s50 = sadd.s32 0, 0
  %p51 = scmp.lt.s32.totalorder %s50, 0
  %s52 = scalar_select %p51, %s50, 0
  %s53 = smul.u32 2, %s52
  %p54 = scmp.lt.s32.totalorder %s53, 1
  %s55 = scalar_select %p54, %s53, 1
  %s56 = smul.addr %s55, 8
  %s57 = scalar_lea.vmem %s0, %s56
  %s58 = sadd.s32 0, 0
  %p59 = scmp.lt.s32.totalorder %s58, 0
  %s60 = scalar_select %p59, %s58, 0
  %s61 = smul.u32 2, %s60
  %p62 = scmp.lt.s32.totalorder %s61, 1
  %s63 = scalar_select %p62, %s61, 1
  %s64 = smul.addr %s63, 8
  %s65 = scalar_lea.vmem %s1, %s64
  %s66 = sadd.s32 0, 0
  %p67 = scmp.lt.s32.totalorder %s66, 0
  %s68 = scalar_select %p67, %s66, 0
  %s69 = smul.u32 2, %s68
  %p70 = scmp.lt.s32.totalorder %s69, 1
  %s71 = scalar_select %p70, %s69, 1
  %s72 = smul.addr %s71, 8
  %s73 = scalar_lea.vmem %s2, %s72
  %s74 = sadd.s32 0, 0
  %p75 = scmp.lt.s32.totalorder %s74, 0
  %s76 = scalar_select %p75, %s74, 0
  %s77 = smul.u32 2, %s76
  %p78 = scmp.lt.s32.totalorder %s77, 1
  %s79 = scalar_select %p78, %s77, 1
  %s80 = smul.addr %s79, 8
  %s81 = scalar_lea.vmem %s0, %s80
  %s82 = sadd.s32 0, 0
  %p83 = scmp.lt.s32.totalorder %s82, 0
  %s84 = scalar_select %p83, %s82, 0
  %s85 = smul.u32 2, %s84
  %s86 = sadd.s32 0, 0
  %p87 = scmp.lt.s32.totalorder %s86, 0
  %s88 = scalar_select %p87, %s86, 0
  %s89 = smul.u32 2, %s88
  %p90 = scmp.lt.s32.totalorder %s89, 1
  %s91 = scalar_select %p90, %s89, 1
  %s92 = smul.addr %s91, 8
  %s93 = scalar_lea.vmem %s1, %s92
  %s94 = sadd.s32 0, 0
  %p95 = scmp.lt.s32.totalorder %s94, 0
  %s96 = scalar_select %p95, %s94, 0
  %s97 = smul.u32 2, %s96
  %s98 = sadd.s32 0, 0
  %p99 = scmp.lt.s32.totalorder %s98, 0
  %s100 = scalar_select %p99, %s98, 0
  %s101 = smul.u32 2, %s100
  %p102 = scmp.lt.s32.totalorder %s101, 1
  %s103 = scalar_select %p102, %s101, 1
  %s104 = smul.addr %s103, 8
  %s105 = scalar_lea.vmem %s2, %s104
  %s106 = sadd.s32 0, 0
  %p107 = scmp.lt.s32.totalorder %s106, 0
  %s108 = scalar_select %p107, %s106, 0
  %s109 = smul.u32 2, %s108
  %p110 = scmp.eq.s32.totalorder 0, 0
  // Predicated region
  $region14: #{focal_loss.1} parent=0 // pred_check
    %p111 = pneg %p110
  $region15: #{focal_loss.1} parent=0 // pred_check_branch
    %113 = sbr.rel (%p111) target = $region17
  $region16: #{focal_loss.1} parent=0 // pred_region
    %114 = vst [vmem:[%s3] sm:$0x7] 0.0
  $region17: #{focal_loss.1} parent=0 // pred_fallthru
    _
  %v115 = vld [vmem:[%s81] sm:$0xff]
  %v116 = vld [vmem:[%s81 + $0x8] sm:$0xff]
  %v117 = vld [vmem:[%s93] sm:$0xff]
  %v118 = vld [vmem:[%s93 + $0x8] sm:$0xff]
  %v119 = vld [vmem:[%s105] sm:$0xff]
  %v120 = vld [vmem:[%s105 + $0x8] sm:$0xff]
  %vm121 = vcmp.eq.f32.partialorder %v117, 1.0
  %vm122 = vcmp.eq.f32.partialorder %v118, 1.0
  %v123 = vsel %vm121, 1, 0
  %v124 = vsel %vm122, 1, 0
  %v125 = vcvt.s32.f32 %v123
  %v126 = vcvt.s32.f32 %v124
  %vm127 = vcmp.lt.f32.partialorder %v117, 1.0
  %vm128 = vcmp.lt.f32.partialorder %v118, 1.0
  %v129 = vsel %vm127, 1, 0
  %v130 = vsel %vm128, 1, 0
  %v131 = vcvt.s32.f32 %v129
  %v132 = vcvt.s32.f32 %v130
  %v133 = vmul.f32 %v125, %v119
  %v134 = vmul.f32 %v126, %v120
  %v135 = vmul.f32 %v131, %v119
  %v136 = vmul.f32 %v132, %v120
  %v137 = vsub.f32 1.0, %v115
  %v138 = vsub.f32 1.0, %v116
  %v139 = vsub.f32 1.0, %v117
  %v140 = vsub.f32 1.0, %v118
  %v141 = vmul.f32 %v139, %v139
  %v142 = vmul.f32 %v140, %v140
  %v143 = vmul.f32 %v141, %v141
  %v144 = vmul.f32 %v142, %v142
  %v145 = vsel %vm121, %v115, %v137
  %v146 = vsel %vm122, %v116, %v138
  %v147 = vlog2.pop %v145
  %v148 = vmul.f32 %v147, 0.6931472
  %v149 = vlog2.pop %v146
  %v150 = vmul.f32 %v149, 0.6931472
  %v151 = vmul.f32 %v137, %v137
  %v152 = vmul.f32 %v138, %v138
  %v153 = vmul.f32 %v148, %v151
  %v154 = vmul.f32 %v150, %v152
  %v155 = vmul.f32 %v153, %v133
  %v156 = vmul.f32 %v154, %v134
  %v157 = vmul.f32 %v115, %v115
  %v158 = vmul.f32 %v116, %v116
  %v159 = vmul.f32 %v148, %v157
  %v160 = vmul.f32 %v150, %v158
  %v161 = vmul.f32 %v159, %v143
  %v162 = vmul.f32 %v160, %v144
  %v163 = vmul.f32 %v161, %v135
  %v164 = vmul.f32 %v162, %v136
  %v165 = vadd.f32 %v155, %v156
  %v166 = vrot.slane %v165, 4
  %v167 = vadd.f32 %v165, %v166
  %v168 = vrot.slane %v167, 2
  %v169 = vadd.f32 %v167, %v168
  %v170 = vrot.slane %v169, 1
  %v171 = vadd.f32 %v169, %v170
  %v172 = vadd.f32 %v163, %v164
  %v173 = vrot.slane %v172, 4
  %v174 = vadd.f32 %v172, %v173
  %v175 = vrot.slane %v174, 2
  %v176 = vadd.f32 %v174, %v175
  %v177 = vrot.slane %v176, 1
  %v178 = vadd.f32 %v176, %v177
  %v179 = vadd.f32 %v133, %v134
  %v180 = vrot.slane %v179, 4
  %v181 = vadd.f32 %v179, %v180
  %v182 = vrot.slane %v181, 2
  %v183 = vadd.f32 %v181, %v182
  %v184 = vrot.slane %v183, 1
  %v185 = vadd.f32 %v183, %v184
  %v186 = vlaneseq
  %v187 = vshrl.u32 %v186, 7
  %vm188 = vcmp.eq.s32.totalorder %v187, 0
  %vm189 = vcmp.eq.s32.totalorder %v187, 1
  %v190 = vsel %vm189, %v178, %v185
  %v191 = vsel %vm188, %v171, %v190
  %v192 = vld [vmem:[%s3] sm:$0x7]
  %v193 = vadd.f32 %v192, %v191
  %194 = vst [vmem:[%s3] sm:$0x7] %v193
  // Predicated region
  $region18: #{focal_loss.1} parent=0 // pred_check
    _
  $region19: #{focal_loss.1} parent=0 // pred_check_branch
    %196 = sbr.rel (0) target = $region21
  $region20: #{focal_loss.1} parent=0 // pred_region
    _
  $region21: #{focal_loss.1} parent=0 // pred_fallthru
    _
  // Predicated region
  $region22: #{focal_loss.1} parent=0 // pred_check
    _
  $region23: #{focal_loss.1} parent=0 // pred_check_branch
    %198 = sbr.rel (0) target = $region25
  $region24: #{focal_loss.1} parent=0 // pred_region
    _
  $region25: #{focal_loss.1} parent=0 // pred_fallthru
    _

</llo_original>
